<compile_context>
chip_gen: v6e
topology: v6e:2x2x1
jax: 0.10.0
libtpu: 0.0.40
codegen_flags: <defaults>
</compile_context>

<pallas_src>
import functools

import jax
import jax.numpy as jnp
from jax.experimental import pallas as pl
from jax.experimental.pallas import tpu as pltpu


def _round_up(n, m):
    return ((n + m - 1) // m) * m


def _accum_slabs(x_ref, y_ref, acc, d_valid, tk):
    """Fused per-128-lane-slab upcast/sub/square/accumulate.

    `d_valid` (static) is the number of valid columns in this tile: slabs fully
    past it are skipped at trace time; the single straddling slab is masked
    (mask code only emitted when needed).  Slices are static, 128-lane aligned
    -> unmasked vector loads, no relayout.
    """
    for i in range(tk // 128):
        base = i * 128
        if base >= d_valid:
            break  # fully-padded slabs of a ragged last tile: skip at trace time
        xs = x_ref[:, pl.ds(base, 128)]
        ys = y_ref[:, pl.ds(base, 128)]
        # Subtract in the native input dtype (bf16 VALU on v6e/v7x); upcast
        # only for the square-accumulate into the f32 accumulator.
        diff = (xs - ys).astype(jnp.float32)
        if base + 128 > d_valid:
            col = base + jax.lax.broadcasted_iota(jnp.int32, diff.shape, 1)
            diff = jnp.where(col < d_valid, diff, 0.0)
        acc = acc + diff * diff
    return acc


def _sqeuclid_kernel(x_ref, y_ref, o_ref, acc_ref, *, d_total, tk, nk):
    """Accumulates per-row sum of squared differences over the D axis.

    Grid is (batch_tiles, reduction_tiles); reduction axis is innermost.
    acc_ref is a lane-dense (bt, 128) f32 accumulator; the cross-lane reduce
    happens once, in the epilogue.
    """
    k = pl.program_id(1)

    @pl.when(k == 0)
    def _():
        acc_ref[...] = jnp.zeros_like(acc_ref)

    d_rem = d_total - (nk - 1) * tk  # static: valid columns in the last tile

    if d_rem == tk:
        # D divides evenly into tk tiles: single unmasked path for every step.
        acc_ref[...] = _accum_slabs(x_ref, y_ref, acc_ref[...], tk, tk)
    elif nk == 1:
        # Only one (ragged) tile: always the masked path.
        acc_ref[...] = _accum_slabs(x_ref, y_ref, acc_ref[...], d_rem, tk)
    else:
        # Masking only on the final reduction tile; all other steps unmasked.
        @pl.when(k != nk - 1)
        def _():
            acc_ref[...] = _accum_slabs(x_ref, y_ref, acc_ref[...], tk, tk)

        @pl.when(k == nk - 1)
        def _():
            acc_ref[...] = _accum_slabs(x_ref, y_ref, acc_ref[...], d_rem, tk)

    @pl.when(k == nk - 1)
    def _():
        # Single cross-lane (XLU) reduce + (bt, 1) store per batch tile.
        o_ref[...] = jnp.sum(acc_ref[...], axis=-1, keepdims=True)


@functools.partial(jax.jit, static_argnames=("bt", "tk"))
def _sqeuclid_pallas(x2d, y2d, bt, tk):
    B, D = x2d.shape
    nb = pl.cdiv(B, bt)
    nk = pl.cdiv(D, tk)

    kernel = functools.partial(_sqeuclid_kernel, d_total=D, tk=tk, nk=nk)

    # 2 inputs x 2 pipeline buffers x (bt x tk) blocks in the input dtype,
    # plus the f32 accumulator, a few bounded per-slab f32 intermediates and
    # the double-buffered (bt, 1) output.  Capped at 48 MiB (v7x-safe: 64 MiB
    # physical VMEM per TensorCore).
    itemsize = x2d.dtype.itemsize
    vmem_needed = (2 * 2 * bt * tk * itemsize          # double-buffered inputs
                   + bt * 128 * 4                      # accumulator
                   + 4 * bt * 128 * 4                  # live per-slab temporaries
                   + 2 * bt * 4)                       # output
    vmem_limit = int(min(vmem_needed + (8 << 20), 48 << 20))

    out = pl.pallas_call(
        kernel,
        out_shape=jax.ShapeDtypeStruct((B, 1), jnp.float32),
        grid_spec=pltpu.PrefetchScalarGridSpec(
            num_scalar_prefetch=0,
            grid=(nb, nk),
            in_specs=[
                # TODO(synk): on v6e (128 MiB VMEM) pipeline_mode=pl.Buffered(3)
                # could hide DMA gaps at step boundaries; left at default 2.
                pl.BlockSpec((bt, tk), lambda b, k: (b, k)),
                pl.BlockSpec((bt, tk), lambda b, k: (b, k)),
            ],
            out_specs=pl.BlockSpec((bt, 1), lambda b, k: (b, 0)),
            scratch_shapes=[pltpu.VMEM((bt, 128), jnp.float32)],
        ),
        compiler_params=pltpu.CompilerParams(
            dimension_semantics=("parallel", "arbitrary"),
            vmem_limit_bytes=vmem_limit,
        ),
    )(x2d, y2d)
    return out[:, 0]


def _choose_tiles(B, D):
    # Reduction tile: big enough to amortize per-step overhead, lane-aligned.
    tk = min(2048, _round_up(D, 128))
    # Batch tile: guarantee >= 2 balanced batch blocks whenever possible so the
    # "parallel" batch axis can be megacore-sharded (v7x has 2 TCs); blocks are
    # multiples of 8 sublanes and capped at 512 rows.
    if B <= 8:
        bt = B  # single tiny block; a full-dim block is always legal
    else:
        nb = max(2, pl.cdiv(B, 512))
        bt = min(512, _round_up(pl.cdiv(B, nb), 8))
    return bt, tk


class SquaredEuclideanDistance:
    """Concrete Distance: per-sample squared L2 between x and y (reduced over
    all non-batch dims).  The abstract base `Distance` has no learnable
    parameters or buffers, so there is nothing to initialize."""

    def __init__(self, small_problem_bytes=1 << 20):
        # Below this total input size, XLA fusion beats pallas_call launch +
        # pipeline-prologue overhead; set to 0 to force the Pallas path.
        self.small_problem_bytes = small_problem_bytes

    def fit(self, **kwargs):
        pass

    def forward(self, x, y):
        assert x.shape == y.shape, "x and y must have the same shape"
        B = x.shape[0]
        x2d = x.reshape(B, -1)
        y2d = y.reshape(B, -1)
        D = x2d.shape[1]

        if not jnp.issubdtype(x2d.dtype, jnp.floating):
            x2d = x2d.astype(jnp.float32)
            y2d = y2d.astype(jnp.float32)

        if B * D * x2d.dtype.itemsize < self.small_problem_bytes:
            # Small-problem fast path: a single fused XLA kernel is faster.
            d = x2d.astype(jnp.float32) - y2d.astype(jnp.float32)
            return jnp.sum(d * d, axis=-1)

        bt, tk = _choose_tiles(B, D)
        return _sqeuclid_pallas(x2d, y2d, bt, tk)

    def __call__(self, x, y):
        return self.forward(x, y)

    # TODO(synk): `adjust_length` uses data-dependent while-loops on host-side
    # tensors; it is control-flow glue around forward(), not a kernel hot path,
    # so it is intentionally not ported to Pallas.


if __name__ == "__main__":
    key = jax.random.PRNGKey(0)
    kx, ky = jax.random.split(key)

    # Force the Pallas path even for these tiny demos (threshold 0).
    dist = SquaredEuclideanDistance(small_problem_bytes=0)

    # 1) Small NCHW inputs consistent with typical image-distance usage.
    x = jax.random.normal(kx, (2, 4, 16, 16), dtype=jnp.float32)
    y = jax.random.normal(ky, (2, 4, 16, 16), dtype=jnp.float32)
    out = jax.block_until_ready(dist(x, y))
    ref = jnp.sum((x - y) ** 2, axis=(1, 2, 3))
    assert out.shape == (2,)
    assert jnp.allclose(out, ref, rtol=1e-5, atol=1e-5), (out, ref)

    # 2) Ragged D: D = 5*7*11 = 385 (not a multiple of 128), B = 3 — exercises
    #    the in-kernel remainder-column masking with zero host-side padding.
    kx2, ky2 = jax.random.split(ky)
    x2 = jax.random.normal(kx2, (3, 5, 7, 11), dtype=jnp.float32)
    y2 = jax.random.normal(ky2, (3, 5, 7, 11), dtype=jnp.float32)
    out2 = jax.block_until_ready(dist(x2, y2))
    ref2 = jnp.sum((x2 - y2) ** 2, axis=(1, 2, 3))
    assert out2.shape == (3,)
    assert jnp.allclose(out2, ref2, rtol=1e-5, atol=1e-5), (out2, ref2)

    # 3) Ragged batch blocks: B = 20 with bt = 16 -> 2 batch blocks (16 + 4
    #    masked rows), plus ragged D — exercises OOB-masked output writes.
    kx3, ky3 = jax.random.split(ky2)
    x3 = jax.random.normal(kx3, (20, 5, 7, 11), dtype=jnp.float32)
    y3 = jax.random.normal(ky3, (20, 5, 7, 11), dtype=jnp.float32)
    out3 = jax.block_until_ready(dist(x3, y3))
    ref3 = jnp.sum((x3 - y3) ** 2, axis=(1, 2, 3))
    assert out3.shape == (20,)
    assert jnp.allclose(out3, ref3, rtol=1e-5, atol=1e-5), (out3, ref3)

    # 4) bf16 inputs: native-dtype subtraction + f32 square-accumulate path,
    #    two balanced batch blocks (B=16, bt=8).
    kx4, ky4 = jax.random.split(ky3)
    x4 = jax.random.normal(kx4, (16, 4, 16, 16), dtype=jnp.bfloat16)
    y4 = jax.random.normal(ky4, (16, 4, 16, 16), dtype=jnp.bfloat16)
    out4 = jax.block_until_ready(dist(x4, y4))
    ref4 = jnp.sum((x4.astype(jnp.float32) - y4.astype(jnp.float32)) ** 2,
                   axis=(1, 2, 3))
    assert out4.shape == (16,)
    assert jnp.allclose(out4, ref4, rtol=5e-2, atol=5e-2), (out4, ref4)

    print("KERNEL_OK")
</pallas_src>

<mosaic_0001>
module attributes {stable_mosaic.version = 11 : i64} {
  func.func @_sqeuclid_kernel(%arg0: i32, %arg1: i32, %arg2: memref<2x1024xf32, #tpu.memory_space<vmem>>, %arg3: memref<2x1024xf32, #tpu.memory_space<vmem>>, %arg4: memref<2x1xf32, #tpu.memory_space<vmem>>, %arg5: memref<2x128xf32, #tpu.memory_space<vmem>>) attributes {dimension_semantics = [#tpu.dimension_semantics<parallel>, #tpu.dimension_semantics<arbitrary>], iteration_bounds = array<i64: 1, 1>, scalar_prefetch = 0 : i64, scratch_operands = 1 : i64, tpu.core_type = #tpu.core_type<tc>, window_params = [{transform_indices = @transform_0, window_bounds = array<i64: 2, 1024>}, {transform_indices = @transform_1, window_bounds = array<i64: 2, 1024>}, {transform_indices = @transform_2, window_bounds = array<i64: 2, 1>}]} {
    %c0_i32 = arith.constant 0 : i32
    %0 = arith.cmpi eq, %arg1, %c0_i32 : i32
    %1 = arith.extui %0 : i1 to i32
    %c0_i32_0 = arith.constant 0 : i32
    %2 = arith.cmpi ne, %1, %c0_i32_0 : i32
    scf.if %2 {
      %cst = arith.constant 0.000000e+00 : f32
      %48 = vector.broadcast %cst : f32 to vector<2x128xf32>
      %c0_31 = arith.constant 0 : index
      %c0_32 = arith.constant 0 : index
      %49 = vector.load %arg5[%c0_31, %c0_32] : memref<2x128xf32, #tpu.memory_space<vmem>>, vector<2x128xf32>
      tpu.vector_store %arg5[%c0_31, %c0_32], %48 {strides = array<i32>} : memref<2x128xf32, #tpu.memory_space<vmem>>, vector<2x128xf32>,
    } else {
    }
    %c0 = arith.constant 0 : index
    %c0_1 = arith.constant 0 : index
    %3 = vector.load %arg5[%c0, %c0_1] : memref<2x128xf32, #tpu.memory_space<vmem>>, vector<2x128xf32>
    %c0_2 = arith.constant 0 : index
    %c0_3 = arith.constant 0 : index
    %4 = vector.load %arg2[%c0_2, %c0_3] : memref<2x1024xf32, #tpu.memory_space<vmem>>, vector<2x128xf32>
    %c0_4 = arith.constant 0 : index
    %c0_5 = arith.constant 0 : index
    %5 = vector.load %arg3[%c0_4, %c0_5] : memref<2x1024xf32, #tpu.memory_space<vmem>>, vector<2x128xf32>
    %6 = arith.subf %4, %5 : vector<2x128xf32>
    %7 = arith.mulf %6, %6 : vector<2x128xf32>
    %8 = arith.addf %3, %7 : vector<2x128xf32>
    %c0_6 = arith.constant 0 : index
    %c128 = arith.constant 128 : index
    %9 = vector.load %arg2[%c0_6, %c128] : memref<2x1024xf32, #tpu.memory_space<vmem>>, vector<2x128xf32>
    %c0_7 = arith.constant 0 : index
    %c128_8 = arith.constant 128 : index
    %10 = vector.load %arg3[%c0_7, %c128_8] : memref<2x1024xf32, #tpu.memory_space<vmem>>, vector<2x128xf32>
    %11 = arith.subf %9, %10 : vector<2x128xf32>
    %12 = arith.mulf %11, %11 : vector<2x128xf32>
    %13 = arith.addf %8, %12 : vector<2x128xf32>
    %c0_9 = arith.constant 0 : index
    %c256 = arith.constant 256 : index
    %14 = vector.load %arg2[%c0_9, %c256] : memref<2x1024xf32, #tpu.memory_space<vmem>>, vector<2x128xf32>
    %c0_10 = arith.constant 0 : index
    %c256_11 = arith.constant 256 : index
    %15 = vector.load %arg3[%c0_10, %c256_11] : memref<2x1024xf32, #tpu.memory_space<vmem>>, vector<2x128xf32>
    %16 = arith.subf %14, %15 : vector<2x128xf32>
    %17 = arith.mulf %16, %16 : vector<2x128xf32>
    %18 = arith.addf %13, %17 : vector<2x128xf32>
    %c0_12 = arith.constant 0 : index
    %c384 = arith.constant 384 : index
    %19 = vector.load %arg2[%c0_12, %c384] : memref<2x1024xf32, #tpu.memory_space<vmem>>, vector<2x128xf32>
    %c0_13 = arith.constant 0 : index
    %c384_14 = arith.constant 384 : index
    %20 = vector.load %arg3[%c0_13, %c384_14] : memref<2x1024xf32, #tpu.memory_space<vmem>>, vector<2x128xf32>
    %21 = arith.subf %19, %20 : vector<2x128xf32>
    %22 = arith.mulf %21, %21 : vector<2x128xf32>
    %23 = arith.addf %18, %22 : vector<2x128xf32>
    %c0_15 = arith.constant 0 : index
    %c512 = arith.constant 512 : index
    %24 = vector.load %arg2[%c0_15, %c512] : memref<2x1024xf32, #tpu.memory_space<vmem>>, vector<2x128xf32>
    %c0_16 = arith.constant 0 : index
    %c512_17 = arith.constant 512 : index
    %25 = vector.load %arg3[%c0_16, %c512_17] : memref<2x1024xf32, #tpu.memory_space<vmem>>, vector<2x128xf32>
    %26 = arith.subf %24, %25 : vector<2x128xf32>
    %27 = arith.mulf %26, %26 : vector<2x128xf32>
    %28 = arith.addf %23, %27 : vector<2x128xf32>
    %c0_18 = arith.constant 0 : index
    %c640 = arith.constant 640 : index
    %29 = vector.load %arg2[%c0_18, %c640] : memref<2x1024xf32, #tpu.memory_space<vmem>>, vector<2x128xf32>
    %c0_19 = arith.constant 0 : index
    %c640_20 = arith.constant 640 : index
    %30 = vector.load %arg3[%c0_19, %c640_20] : memref<2x1024xf32, #tpu.memory_space<vmem>>, vector<2x128xf32>
    %31 = arith.subf %29, %30 : vector<2x128xf32>
    %32 = arith.mulf %31, %31 : vector<2x128xf32>
    %33 = arith.addf %28, %32 : vector<2x128xf32>
    %c0_21 = arith.constant 0 : index
    %c768 = arith.constant 768 : index
    %34 = vector.load %arg2[%c0_21, %c768] : memref<2x1024xf32, #tpu.memory_space<vmem>>, vector<2x128xf32>
    %c0_22 = arith.constant 0 : index
    %c768_23 = arith.constant 768 : index
    %35 = vector.load %arg3[%c0_22, %c768_23] : memref<2x1024xf32, #tpu.memory_space<vmem>>, vector<2x128xf32>
    %36 = arith.subf %34, %35 : vector<2x128xf32>
    %37 = arith.mulf %36, %36 : vector<2x128xf32>
    %38 = arith.addf %33, %37 : vector<2x128xf32>
    %c0_24 = arith.constant 0 : index
    %c896 = arith.constant 896 : index
    %39 = vector.load %arg2[%c0_24, %c896] : memref<2x1024xf32, #tpu.memory_space<vmem>>, vector<2x128xf32>
    %c0_25 = arith.constant 0 : index
    %c896_26 = arith.constant 896 : index
    %40 = vector.load %arg3[%c0_25, %c896_26] : memref<2x1024xf32, #tpu.memory_space<vmem>>, vector<2x128xf32>
    %41 = arith.subf %39, %40 : vector<2x128xf32>
    %42 = arith.mulf %41, %41 : vector<2x128xf32>
    %43 = arith.addf %38, %42 : vector<2x128xf32>
    %c0_27 = arith.constant 0 : index
    %c0_28 = arith.constant 0 : index
    %44 = vector.load %arg5[%c0_27, %c0_28] : memref<2x128xf32, #tpu.memory_space<vmem>>, vector<2x128xf32>
    tpu.vector_store %arg5[%c0_27, %c0_28], %43 {strides = array<i32>} : memref<2x128xf32, #tpu.memory_space<vmem>>, vector<2x128xf32>,
    %c0_i32_29 = arith.constant 0 : i32
    %45 = arith.cmpi eq, %arg1, %c0_i32_29 : i32
    %46 = arith.extui %45 : i1 to i32
    %c0_i32_30 = arith.constant 0 : i32
    %47 = arith.cmpi ne, %46, %c0_i32_30 : i32
    scf.if %47 {
      %c0_31 = arith.constant 0 : index
      %c0_32 = arith.constant 0 : index
      %48 = vector.load %arg5[%c0_31, %c0_32] : memref<2x128xf32, #tpu.memory_space<vmem>>, vector<2x128xf32>
      %cst = arith.constant dense<0.000000e+00> : vector<2xf32>
      %49 = vector.multi_reduction <add>, %48, %cst [1] : vector<2x128xf32> to vector<2xf32>
      %50 = vector.shape_cast %49 : vector<2xf32> to vector<2x1xf32>
      %c0_33 = arith.constant 0 : index
      %c0_34 = arith.constant 0 : index
      %51 = vector.load %arg4[%c0_33, %c0_34] : memref<2x1xf32, #tpu.memory_space<vmem>>, vector<2x1xf32>
      tpu.vector_store %arg4[%c0_33, %c0_34], %50 {strides = array<i32>} : memref<2x1xf32, #tpu.memory_space<vmem>>, vector<2x1xf32>,
    } else {
    }
    return
  }
  func.func @transform_0(%arg0: i32, %arg1: i32) -> (i32, i32) {
    %c0_i32 = arith.constant 0 : i32
    return %arg0, %arg1 : i32, i32
  }
  func.func @transform_1(%arg0: i32, %arg1: i32) -> (i32, i32) {
    %c0_i32 = arith.constant 0 : i32
    return %arg0, %arg1 : i32, i32
  }
  func.func @transform_2(%arg0: i32, %arg1: i32) -> (i32, i32) {
    %c0_i32 = arith.constant 0 : i32
    %c0_i32_0 = arith.constant 0 : i32
    return %arg0, %c0_i32 : i32, i32
  }
}

</mosaic_0001>

<llo_original>
// kernel: _sqeuclid_pallas.1
$region0: #{_sqeuclid_pallas.1}
  #allocation0 [shape = 'u32[]', space=smem, size = 0x4, offset = 0x4, fixed_abs, tag = 'smem constant byte address 0x4 - core index']
  #allocation1 [shape = 'u32[144,128]{1,0:T(1,128)}', space=vmem, size = 0x12000, scoped, tag = 'internal scratch']
  #allocation2 [shape = 'f32[2,128]{1,0:T(2,128)}', space=vmem, size = 0x400, scoped, tag = 'scratch operand']
  %s0 = inlined_call_operand.hbm [shape: f32[2,1024], index: 0, kind: input, shape index: {}]
  %s1 = inlined_call_operand.hbm [shape: f32[2,1024], index: 1, kind: input, shape index: {}]
  %s2 = inlined_call_operand.vmem [shape: f32[2,1], index: 2, kind: output, shape index: {}]
  %s3 = sld [smem:[#allocation0]]
  $region34: #{_sqeuclid_pallas.1} parent=0
    _
  %s5 = ssub.s32 1, %s3
  %s6 = scalar_select 0, %s5, %s3
  $region1: #{_sqeuclid_pallas.1} parent=0
    #allocation3 [shape = 'u8[8192]{0}', space=vmem, size = 0x2000, scoped, tag = 'input window, operand 0, single buffered']
    #allocation4 [shape = 's32[1]{0}', space=sflag, size = 0x4, scoped, tag = 'scoped memory for _sqeuclid_pallas.1']
    #allocation5 [shape = 'u8[8192]{0}', space=vmem, size = 0x2000, scoped, tag = 'input window, operand 1, single buffered']
    #allocation6 [shape = 's32[1]{0}', space=sflag, size = 0x4, scoped, tag = 'scoped memory for _sqeuclid_pallas.1']
    %7 = vsyncpa [#allocation4], 0
    %8 = vsyncpa [#allocation6], 0
    // Predicated region
    $region2: #{_sqeuclid_pallas.1} parent=1 // pred_check
      _
    $region3: #{_sqeuclid_pallas.1} parent=1 // pred_check_branch
      %10 = sbr.rel (0) target = $region5
    $region4: #{_sqeuclid_pallas.1} parent=1 // pred_region
      %s12 = ssub.s32 256, 256
      %13 = vsyncadd [#allocation4], %s12
      %s15 = sshll.u32 [#allocation3], 4
      %s16 = int_to_ptr.vmem [resolvable:$true] %s15
      %18 = dma.hbm_to_vmem [thread:$0]  %s0, 256, %s16, [#allocation4]
    $region5: #{_sqeuclid_pallas.1} parent=1 // pred_fallthru
      _
    // Predicated region
    $region6: #{_sqeuclid_pallas.1} parent=1 // pred_check
      _
    $region7: #{_sqeuclid_pallas.1} parent=1 // pred_check_branch
      %20 = sbr.rel (0) target = $region9
    $region8: #{_sqeuclid_pallas.1} parent=1 // pred_region
      %s22 = ssub.s32 256, 256
      %23 = vsyncadd [#allocation6], %s22
      %s25 = sshll.u32 [#allocation5], 4
      %s26 = int_to_ptr.vmem [resolvable:$true] %s25
      %28 = dma.hbm_to_vmem [thread:$0]  %s1, 256, %s26, [#allocation6]
    $region9: #{_sqeuclid_pallas.1} parent=1 // pred_fallthru
      _
    // Predicated region
    $region10: #{_sqeuclid_pallas.1} parent=1 // pred_check
      _
    $region11: #{_sqeuclid_pallas.1} parent=1 // pred_check_branch
      %30 = sbr.rel (0) target = $region13
    $region12: #{_sqeuclid_pallas.1} parent=1 // pred_region
      %31 = dma.done [#allocation4], 256
    $region13: #{_sqeuclid_pallas.1} parent=1 // pred_fallthru
      _
    // Predicated region
    $region14: #{_sqeuclid_pallas.1} parent=1 // pred_check
      _
    $region15: #{_sqeuclid_pallas.1} parent=1 // pred_check_branch
      %33 = sbr.rel (0) target = $region17
    $region16: #{_sqeuclid_pallas.1} parent=1 // pred_region
      %34 = dma.done [#allocation6], 256
    $region17: #{_sqeuclid_pallas.1} parent=1 // pred_fallthru
      _
    %p35 = scmp.eq.s32.totalorder 0, 0
    // Predicated region
    $region18: #{_sqeuclid_pallas.1} parent=1 // pred_check
      %p36 = pneg %p35
    $region19: #{_sqeuclid_pallas.1} parent=1 // pred_check_branch
      %38 = sbr.rel (%p36) target = $region21
    $region20: #{_sqeuclid_pallas.1} parent=1 // pred_region
      %39 = vst [vmem:[#allocation2] sm:$0x3] 0.0
    $region21: #{_sqeuclid_pallas.1} parent=1 // pred_fallthru
      _
    %v40 = vld [vmem:[#allocation2] sm:$0x3]
    %v41 = vld [vmem:[#allocation3] sm:$0x3]
    %v42 = vld [vmem:[#allocation5] sm:$0x3]
    %v43 = vsub.f32 %v41, %v42
    %v44 = vmul.f32 %v43, %v43
    %v45 = vadd.f32 %v40, %v44
    %v46 = vld [vmem:[#allocation3 + $0x2] sm:$0x3]
    %v47 = vld [vmem:[#allocation5 + $0x2] sm:$0x3]
    %v48 = vsub.f32 %v46, %v47
    %v49 = vmul.f32 %v48, %v48
    %v50 = vadd.f32 %v45, %v49
    %v51 = vld [vmem:[#allocation3 + $0x4] sm:$0x3]
    %v52 = vld [vmem:[#allocation5 + $0x4] sm:$0x3]
    %v53 = vsub.f32 %v51, %v52
    %v54 = vmul.f32 %v53, %v53
    %v55 = vadd.f32 %v50, %v54
    %v56 = vld [vmem:[#allocation3 + $0x6] sm:$0x3]
    %v57 = vld [vmem:[#allocation5 + $0x6] sm:$0x3]
    %v58 = vsub.f32 %v56, %v57
    %v59 = vmul.f32 %v58, %v58
    %v60 = vadd.f32 %v55, %v59
    %v61 = vld [vmem:[#allocation3 + $0x8] sm:$0x3]
    %v62 = vld [vmem:[#allocation5 + $0x8] sm:$0x3]
    %v63 = vsub.f32 %v61, %v62
    %v64 = vmul.f32 %v63, %v63
    %v65 = vadd.f32 %v60, %v64
    %v66 = vld [vmem:[#allocation3 + $0xa] sm:$0x3]
    %v67 = vld [vmem:[#allocation5 + $0xa] sm:$0x3]
    %v68 = vsub.f32 %v66, %v67
    %v69 = vmul.f32 %v68, %v68
    %v70 = vadd.f32 %v65, %v69
    %v71 = vld [vmem:[#allocation3 + $0xc] sm:$0x3]
    %v72 = vld [vmem:[#allocation5 + $0xc] sm:$0x3]
    %v73 = vsub.f32 %v71, %v72
    %v74 = vmul.f32 %v73, %v73
    %v75 = vadd.f32 %v70, %v74
    %v76 = vld [vmem:[#allocation3 + $0xe] sm:$0x3]
    %v77 = vld [vmem:[#allocation5 + $0xe] sm:$0x3]
    %v78 = vsub.f32 %v76, %v77
    %v79 = vmul.f32 %v78, %v78
    %v80 = vadd.f32 %v75, %v79
    %81 = vst [vmem:[#allocation2] sm:$0x3] %v80
    // Predicated region
    $region22: #{_sqeuclid_pallas.1} parent=1 // pred_check
      %p82 = pneg %p35
    $region23: #{_sqeuclid_pallas.1} parent=1 // pred_check_branch
      %84 = sbr.rel (%p82) target = $region25
    $region24: #{_sqeuclid_pallas.1} parent=1 // pred_region
      %v85 = vld [vmem:[#allocation2] sm:$0x3]
      %vm86 = vcmask 1041408
      %v87 = vsel %vm86, %v85, 0.0
      %88 = vadd.xlane.f32.xlu0 %v87
      %v89 = vpop.xlane.xlu0 %88
      %vm90 = vcmask 1024
      %91 = vst.msk [vmem:[%s2] sm:$0x3] %vm90, %v89
    $region25: #{_sqeuclid_pallas.1} parent=1 // pred_fallthru
      _
    // Predicated region
    $region26: #{_sqeuclid_pallas.1} parent=1 // pred_check
      _
    $region27: #{_sqeuclid_pallas.1} parent=1 // pred_check_branch
      %93 = sbr.rel (0) target = $region29
    $region28: #{_sqeuclid_pallas.1} parent=1 // pred_region
      _
    $region29: #{_sqeuclid_pallas.1} parent=1 // pred_fallthru
      _
    // Predicated region
    $region30: #{_sqeuclid_pallas.1} parent=1 // pred_check
      _
    $region31: #{_sqeuclid_pallas.1} parent=1 // pred_check_branch
      %95 = sbr.rel (0) target = $region33
    $region32: #{_sqeuclid_pallas.1} parent=1 // pred_region
      _
    $region33: #{_sqeuclid_pallas.1} parent=1 // pred_fallthru
      _
    %96 = vsyncpa [#allocation4], 1
    %97 = vsyncpa [#allocation6], 1

</llo_original>
